<compile_context>
chip_gen: v7x
topology: tpu7x:2x2x1
jax: 0.10.0
libtpu: 0.0.40
codegen_flags: <defaults>
</compile_context>

<pallas_src>
import jax
import jax.numpy as jnp
from jax.experimental import pallas as pl
from jax.experimental.pallas import tpu as pltpu

SUBLANE = 8


def _round_up(x, m):
    return ((x + m - 1) // m) * m


def _sigmoid(x):
    # Exact sigmoid via a single EUP transcendental (tanh).
    return 0.5 * jnp.tanh(0.5 * x) + 0.5


def net_kernel(x_ref, w1_ref, b1_ref, w2_ref, b2_ref, w3_ref, b3_ref, o_ref):
    # Layer 1 (encode already folded into w1/b1 by the wrapper) -> sigmoid
    h1 = _sigmoid(
        jnp.dot(x_ref[...].astype(w1_ref.dtype), w1_ref[...],
                preferred_element_type=jnp.float32) + b1_ref[...]
    )
    # Layer 2 -> sigmoid
    h2 = _sigmoid(
        jnp.dot(h1.astype(w2_ref.dtype), w2_ref[...],
                preferred_element_type=jnp.float32) + b2_ref[...]
    )
    # Layer 3 (no activation)
    o_ref[...] = (
        jnp.dot(h2.astype(w3_ref.dtype), w3_ref[...],
                preferred_element_type=jnp.float32) + b3_ref[...]
    ).astype(o_ref.dtype)


def prepare_params(params, weight_dtype=jnp.float32):
    """One-time glue: transpose torch (out,in) weights to (in,out) and reshape
    biases to (1,out) rows.  Call once and cache.  weight_dtype=jnp.bfloat16 is
    worthwhile on v6e/v7x (bf16-native MXU/VPU/EUP); keep f32 on v5e."""
    return {
        "w1": params["w1"].T.astype(weight_dtype),        # (D_in, H)
        "w2": params["w2"].T.astype(weight_dtype),        # (H, H)
        "w3": params["w3"].T.astype(weight_dtype),        # (H, D_out)
        "b1": params["b1"].astype(jnp.float32).reshape(1, -1),
        "b2": params["b2"].astype(jnp.float32).reshape(1, -1),
        "b3": params["b3"].astype(jnp.float32).reshape(1, -1),
    }


def _choose_tn(N, tn_max=2048):
    """Batch tile size: amortize per-step overhead, minimize padded rows, and
    prefer an even, >=2-step grid (v7x has 2 TensorCores; v5e/v6e don't care)."""
    n8 = _round_up(N, SUBLANE)
    if n8 <= 2 * SUBLANE:
        return n8                         # tiny batch: single tile
    n_tiles = max(2, pl.cdiv(n8, tn_max))
    if n_tiles % 2:
        n_tiles += 1                      # balanced 2-TC split on v7x
    return _round_up(pl.cdiv(n8, n_tiles), SUBLANE)


def net_forward(x, prepped, *, tn=None):
    """x: (N, D_in) float32.  prepped: output of prepare_params()."""
    N, D_in = x.shape
    d_in, H = prepped["w1"].shape
    D_out = prepped["w3"].shape[1]
    assert D_in == d_in

    # --- encode() stats over the FULL batch, folded into layer 1 (wrapper-side,
    # one tiny (D_in,H)-sized op per call; removes 2 VPU ops per element in-kernel).
    xmin = jnp.min(x, axis=0)
    xmax = jnp.max(x, axis=0)
    # Matches PyTorch: constant features give inf/nan there too.
    inv_range = 1.0 / (xmax - xmin)

    w1_f32 = prepped["w1"].astype(jnp.float32)
    w1 = (inv_range[:, None] * w1_f32).astype(prepped["w1"].dtype)
    b1 = prepped["b1"] - (xmin * inv_range)[None, :] @ w1_f32
    w2, b2 = prepped["w2"], prepped["b2"]
    w3, b3 = prepped["w3"], prepped["b3"]

    # --- batch tiling (no lane padding: D_in / D_out blocks use the full dim).
    if tn is None:
        tn = _choose_tn(N)
    else:
        tn = min(_round_up(tn, SUBLANE), _round_up(N, SUBLANE))
    N_p = _round_up(N, tn)
    x_p = x if N_p == N else jnp.pad(x, ((0, N_p - N), (0, 0)))

    grid = (N_p // tn,)

    def full(shape):  # untiled operand, VMEM-resident across all grid steps
        return pl.BlockSpec(shape, lambda i: (0, 0))

    itemsize = lambda a: a.size * a.dtype.itemsize
    cost = pl.CostEstimate(
        flops=2 * N_p * (D_in * H + H * H + H * D_out),
        transcendentals=2 * N_p * H,
        bytes_accessed=(itemsize(x_p) + itemsize(w1) + itemsize(w2) + itemsize(w3)
                        + itemsize(b1) + itemsize(b2) + itemsize(b3)
                        + N_p * D_out * 4),
    )

    y_p = pl.pallas_call(
        net_kernel,
        out_shape=jax.ShapeDtypeStruct((N_p, D_out), jnp.float32),
        grid=grid,
        in_specs=[
            pl.BlockSpec((tn, D_in), lambda i: (i, 0)),   # x batch tile
            full((D_in, H)),   # w1 (encode folded in)
            full((1, H)),      # b1 (encode folded in)
            full((H, H)),      # w2
            full((1, H)),      # b2
            full((H, D_out)),  # w3
            full((1, D_out)),  # b3
        ],
        out_specs=pl.BlockSpec((tn, D_out), lambda i: (i, 0)),
        compiler_params=pltpu.CompilerParams(
            dimension_semantics=("parallel",),   # megacore-shard batch axis (v7x)
        ),
        cost_estimate=cost,
    )(x_p, w1, b1, w2, b2, w3, b3)

    return y_p if N_p == N else y_p[:N]


def init_params(key, D_in, H, D_out):
    """Deterministic synthetic parameters with PyTorch nn.Linear shape convention."""
    ks = jax.random.split(key, 6)
    scale = 0.1
    return {
        "w1": scale * jax.random.normal(ks[0], (H, D_in), jnp.float32),
        "b1": scale * jax.random.normal(ks[1], (H,), jnp.float32),
        "w2": scale * jax.random.normal(ks[2], (H, H), jnp.float32),
        "b2": scale * jax.random.normal(ks[3], (H,), jnp.float32),
        "w3": scale * jax.random.normal(ks[4], (D_out, H), jnp.float32),
        "b3": scale * jax.random.normal(ks[5], (D_out,), jnp.float32),
    }


def net_forward_ref(x, params):
    """Pure-JAX reference replicating the PyTorch forward pass."""
    xmin = jnp.min(x, axis=0, keepdims=True)
    xmax = jnp.max(x, axis=0, keepdims=True)
    xe = (x - xmin) / (xmax - xmin)
    h1 = jax.nn.sigmoid(xe @ params["w1"].T + params["b1"])
    h2 = jax.nn.sigmoid(h1 @ params["w2"].T + params["b2"])
    return h2 @ params["w3"].T + params["b3"]


if __name__ == "__main__":
    key = jax.random.PRNGKey(0)
    k_x, k_p, k_x2, k_x3 = jax.random.split(key, 4)

    # Small shapes consistent with the module: batch of spectra, D_in labels -> D_out flux.
    N, D_in, H, D_out = 8, 16, 32, 24
    x = jax.random.uniform(k_x, (N, D_in), jnp.float32, minval=-1.0, maxval=1.0)
    params = init_params(k_p, D_in, H, D_out)
    prepped = prepare_params(params)  # one-time transpose (cacheable)

    # Exact tanh-based sigmoid: no approx-reciprocal slack needed anymore.
    TOL = 1e-4

    y = jax.block_until_ready(net_forward(x, prepped))
    y_ref = net_forward_ref(x, params)
    assert y.shape == (N, D_out)
    assert jnp.allclose(y, y_ref, atol=TOL, rtol=TOL), "mismatch vs reference (small batch)"

    # Tiled / pipelined path: auto tn -> 2 even grid steps, zero padded rows.
    N2 = 1040
    x2 = jax.random.uniform(k_x2, (N2, D_in), jnp.float32, minval=-1.0, maxval=1.0)
    y2 = jax.block_until_ready(net_forward(x2, prepped))
    y2_ref = net_forward_ref(x2, params)
    assert y2.shape == (N2, D_out)
    assert jnp.allclose(y2, y2_ref, atol=TOL, rtol=TOL), "mismatch vs reference (tiled batch)"

    # Ragged batch with explicit tn: exercises the padded-rows path (rows padded
    # with zeros flow through folded layer 1 -> finite values, sliced off).
    N3 = 1000
    x3 = jax.random.uniform(k_x3, (N3, D_in), jnp.float32, minval=-1.0, maxval=1.0)
    y3 = jax.block_until_ready(net_forward(x3, prepped, tn=512))
    y3_ref = net_forward_ref(x3, params)
    assert y3.shape == (N3, D_out)
    assert jnp.allclose(y3, y3_ref, atol=TOL, rtol=TOL), "mismatch vs reference (ragged batch)"

    print("KERNEL_OK")
</pallas_src>

<mosaic_0001>
module attributes {stable_mosaic.version = 11 : i64} {
  func.func @net_kernel(%arg0: i32, %arg1: memref<8x16xf32, #tpu.memory_space<vmem>>, %arg2: memref<16x32xf32, #tpu.memory_space<vmem>>, %arg3: memref<1x32xf32, #tpu.memory_space<vmem>>, %arg4: memref<32x32xf32, #tpu.memory_space<vmem>>, %arg5: memref<1x32xf32, #tpu.memory_space<vmem>>, %arg6: memref<32x24xf32, #tpu.memory_space<vmem>>, %arg7: memref<1x24xf32, #tpu.memory_space<vmem>>, %arg8: memref<8x24xf32, #tpu.memory_space<vmem>>) attributes {dimension_semantics = [#tpu.dimension_semantics<parallel>], iteration_bounds = array<i64: 1>, scalar_prefetch = 0 : i64, scratch_operands = 0 : i64, tpu.core_type = #tpu.core_type<tc>, window_params = [{transform_indices = @transform_0, window_bounds = array<i64: 8, 16>}, {pipeline_mode = #tpu.pipeline_mode<synchronous>, transform_indices = @transform_1, window_bounds = array<i64: 16, 32>}, {pipeline_mode = #tpu.pipeline_mode<synchronous>, transform_indices = @transform_2, window_bounds = array<i64: 1, 32>}, {pipeline_mode = #tpu.pipeline_mode<synchronous>, transform_indices = @transform_3, window_bounds = array<i64: 32, 32>}, {pipeline_mode = #tpu.pipeline_mode<synchronous>, transform_indices = @transform_4, window_bounds = array<i64: 1, 32>}, {pipeline_mode = #tpu.pipeline_mode<synchronous>, transform_indices = @transform_5, window_bounds = array<i64: 32, 24>}, {pipeline_mode = #tpu.pipeline_mode<synchronous>, transform_indices = @transform_6, window_bounds = array<i64: 1, 24>}, {transform_indices = @transform_7, window_bounds = array<i64: 8, 24>}]} {
    %c0 = arith.constant 0 : index
    %c0_0 = arith.constant 0 : index
    %0 = vector.load %arg1[%c0, %c0_0] : memref<8x16xf32, #tpu.memory_space<vmem>>, vector<8x16xf32>
    %c0_1 = arith.constant 0 : index
    %c0_2 = arith.constant 0 : index
    %1 = vector.load %arg2[%c0_1, %c0_2] : memref<16x32xf32, #tpu.memory_space<vmem>>, vector<16x32xf32>
    %cst = arith.constant dense<0.000000e+00> : vector<8x32xf32>
    %2 = tpu.matmul %0, %1, %cst {dimension_numbers = #tpu.dot_dimension_numbers<[1], [0], [0], [1], [0, 0, 1, 1], [], []>} : vector<8x16xf32>, vector<16x32xf32>, vector<8x32xf32> -> vector<8x32xf32>
    %c0_3 = arith.constant 0 : index
    %c0_4 = arith.constant 0 : index
    %3 = vector.load %arg3[%c0_3, %c0_4] : memref<1x32xf32, #tpu.memory_space<vmem>>, vector<1x32xf32>
    %4 = vector.broadcast %3 : vector<1x32xf32> to vector<8x32xf32>
    %5 = arith.addf %2, %4 : vector<8x32xf32>
    %cst_5 = arith.constant 5.000000e-01 : f32
    %6 = vector.broadcast %cst_5 : f32 to vector<8x32xf32>
    %7 = arith.mulf %6, %5 : vector<8x32xf32>
    %8 = math.tanh %7 : vector<8x32xf32>
    %cst_6 = arith.constant 5.000000e-01 : f32
    %9 = vector.broadcast %cst_6 : f32 to vector<8x32xf32>
    %10 = arith.mulf %9, %8 : vector<8x32xf32>
    %cst_7 = arith.constant 5.000000e-01 : f32
    %11 = vector.broadcast %cst_7 : f32 to vector<8x32xf32>
    %12 = arith.addf %10, %11 : vector<8x32xf32>
    %c0_8 = arith.constant 0 : index
    %c0_9 = arith.constant 0 : index
    %13 = vector.load %arg4[%c0_8, %c0_9] : memref<32x32xf32, #tpu.memory_space<vmem>>, vector<32x32xf32>
    %cst_10 = arith.constant dense<0.000000e+00> : vector<8x32xf32>
    %14 = tpu.matmul %12, %13, %cst_10 {dimension_numbers = #tpu.dot_dimension_numbers<[1], [0], [0], [1], [0, 0, 1, 1], [], []>} : vector<8x32xf32>, vector<32x32xf32>, vector<8x32xf32> -> vector<8x32xf32>
    %c0_11 = arith.constant 0 : index
    %c0_12 = arith.constant 0 : index
    %15 = vector.load %arg5[%c0_11, %c0_12] : memref<1x32xf32, #tpu.memory_space<vmem>>, vector<1x32xf32>
    %16 = vector.broadcast %15 : vector<1x32xf32> to vector<8x32xf32>
    %17 = arith.addf %14, %16 : vector<8x32xf32>
    %cst_13 = arith.constant 5.000000e-01 : f32
    %18 = vector.broadcast %cst_13 : f32 to vector<8x32xf32>
    %19 = arith.mulf %18, %17 : vector<8x32xf32>
    %20 = math.tanh %19 : vector<8x32xf32>
    %cst_14 = arith.constant 5.000000e-01 : f32
    %21 = vector.broadcast %cst_14 : f32 to vector<8x32xf32>
    %22 = arith.mulf %21, %20 : vector<8x32xf32>
    %cst_15 = arith.constant 5.000000e-01 : f32
    %23 = vector.broadcast %cst_15 : f32 to vector<8x32xf32>
    %24 = arith.addf %22, %23 : vector<8x32xf32>
    %c0_16 = arith.constant 0 : index
    %c0_17 = arith.constant 0 : index
    %25 = vector.load %arg6[%c0_16, %c0_17] : memref<32x24xf32, #tpu.memory_space<vmem>>, vector<32x24xf32>
    %cst_18 = arith.constant dense<0.000000e+00> : vector<8x24xf32>
    %26 = tpu.matmul %24, %25, %cst_18 {dimension_numbers = #tpu.dot_dimension_numbers<[1], [0], [0], [1], [0, 0, 1, 1], [], []>} : vector<8x32xf32>, vector<32x24xf32>, vector<8x24xf32> -> vector<8x24xf32>
    %c0_19 = arith.constant 0 : index
    %c0_20 = arith.constant 0 : index
    %27 = vector.load %arg7[%c0_19, %c0_20] : memref<1x24xf32, #tpu.memory_space<vmem>>, vector<1x24xf32>
    %28 = vector.broadcast %27 : vector<1x24xf32> to vector<8x24xf32>
    %29 = arith.addf %26, %28 : vector<8x24xf32>
    %c0_21 = arith.constant 0 : index
    %c0_22 = arith.constant 0 : index
    %30 = vector.load %arg8[%c0_21, %c0_22] : memref<8x24xf32, #tpu.memory_space<vmem>>, vector<8x24xf32>
    tpu.vector_store %arg8[%c0_21, %c0_22], %29 {strides = array<i32>} : memref<8x24xf32, #tpu.memory_space<vmem>>, vector<8x24xf32>,
    return
  }
  func.func @transform_0(%arg0: i32) -> (i32, i32) {
    %c0_i32 = arith.constant 0 : i32
    %c0_i32_0 = arith.constant 0 : i32
    return %arg0, %c0_i32 : i32, i32
  }
  func.func @transform_1(%arg0: i32) -> (i32, i32) {
    %c0_i32 = arith.constant 0 : i32
    %c0_i32_0 = arith.constant 0 : i32
    %c0_i32_1 = arith.constant 0 : i32
    return %c0_i32, %c0_i32_0 : i32, i32
  }
  func.func @transform_2(%arg0: i32) -> (i32, i32) {
    %c0_i32 = arith.constant 0 : i32
    %c0_i32_0 = arith.constant 0 : i32
    %c0_i32_1 = arith.constant 0 : i32
    return %c0_i32, %c0_i32_0 : i32, i32
  }
  func.func @transform_3(%arg0: i32) -> (i32, i32) {
    %c0_i32 = arith.constant 0 : i32
    %c0_i32_0 = arith.constant 0 : i32
    %c0_i32_1 = arith.constant 0 : i32
    return %c0_i32, %c0_i32_0 : i32, i32
  }
  func.func @transform_4(%arg0: i32) -> (i32, i32) {
    %c0_i32 = arith.constant 0 : i32
    %c0_i32_0 = arith.constant 0 : i32
    %c0_i32_1 = arith.constant 0 : i32
    return %c0_i32, %c0_i32_0 : i32, i32
  }
  func.func @transform_5(%arg0: i32) -> (i32, i32) {
    %c0_i32 = arith.constant 0 : i32
    %c0_i32_0 = arith.constant 0 : i32
    %c0_i32_1 = arith.constant 0 : i32
    return %c0_i32, %c0_i32_0 : i32, i32
  }
  func.func @transform_6(%arg0: i32) -> (i32, i32) {
    %c0_i32 = arith.constant 0 : i32
    %c0_i32_0 = arith.constant 0 : i32
    %c0_i32_1 = arith.constant 0 : i32
    return %c0_i32, %c0_i32_0 : i32, i32
  }
  func.func @transform_7(%arg0: i32) -> (i32, i32) {
    %c0_i32 = arith.constant 0 : i32
    %c0_i32_0 = arith.constant 0 : i32
    return %arg0, %c0_i32 : i32, i32
  }
}

</mosaic_0001>

<llo_original>
// kernel: tpu_custom_call.1
$region0: #{tpu_custom_call.1}
  #allocation0 [shape = 'u32[]', space=smem, size = 0x4, offset = 0x4, fixed_abs, tag = 'smem constant byte address 0x4 - core index']
  #allocation1 [shape = 'u32[144,128]{1,0:T(1,128)}', space=vmem, size = 0x12000, scoped, tag = 'internal scratch']
  %s0 = inlined_call_operand.vmem [shape: f32[8,16], index: 0, kind: input, shape index: {}]
  %s1 = inlined_call_operand.vmem [shape: f32[16,32], index: 1, kind: input, shape index: {}]
  %s2 = inlined_call_operand.vmem [shape: f32[1,32], index: 2, kind: input, shape index: {}]
  %s3 = inlined_call_operand.vmem [shape: f32[32,32], index: 3, kind: input, shape index: {}]
  %s4 = inlined_call_operand.vmem [shape: f32[1,32], index: 4, kind: input, shape index: {}]
  %s5 = inlined_call_operand.vmem [shape: f32[32,24], index: 5, kind: input, shape index: {}]
  %s6 = inlined_call_operand.vmem [shape: f32[1,24], index: 6, kind: input, shape index: {}]
  %s7 = inlined_call_operand.hbm [shape: f32[8,24], index: 7, kind: output, shape index: {}]
  %s8 = sld [smem:[#allocation0]]
  $region38: #{tpu_custom_call.1} parent=0
    _
  %s10 = ssub.s32 1, %s8
  %s11 = scalar_select 0, %s10, %s8
  $region1: #{tpu_custom_call.1} parent=0
    #allocation2 [shape = 'u8[4096]{0}', space=vmem, size = 0x1000, scoped, tag = 'output window, operand 0, single buffered']
    #allocation3 [shape = 's32[1]{0}', space=sflag, size = 0x4, scoped, tag = 'scoped memory for tpu_custom_call.1']
    %12 = vsyncpa [#allocation3], 0
    // Predicated region
    $region2: #{tpu_custom_call.1} parent=1 // pred_check
      _
    $region3: #{tpu_custom_call.1} parent=1 // pred_check_branch
      %14 = sbr.rel (0) target = $region5
    $region4: #{tpu_custom_call.1} parent=1 // pred_region
      _
    $region5: #{tpu_custom_call.1} parent=1 // pred_fallthru
      _
    // Predicated region
    $region6: #{tpu_custom_call.1} parent=1 // pred_check
      _
    $region7: #{tpu_custom_call.1} parent=1 // pred_check_branch
      %16 = sbr.rel (0) target = $region9
    $region8: #{tpu_custom_call.1} parent=1 // pred_region
      _
    $region9: #{tpu_custom_call.1} parent=1 // pred_fallthru
      _
    // Predicated region
    $region10: #{tpu_custom_call.1} parent=1 // pred_check
      _
    $region11: #{tpu_custom_call.1} parent=1 // pred_check_branch
      %18 = sbr.rel (0) target = $region13
    $region12: #{tpu_custom_call.1} parent=1 // pred_region
      _
    $region13: #{tpu_custom_call.1} parent=1 // pred_fallthru
      _
    // Predicated region
    $region14: #{tpu_custom_call.1} parent=1 // pred_check
      _
    $region15: #{tpu_custom_call.1} parent=1 // pred_check_branch
      %20 = sbr.rel (0) target = $region17
    $region16: #{tpu_custom_call.1} parent=1 // pred_region
      _
    $region17: #{tpu_custom_call.1} parent=1 // pred_fallthru
      _
    // Predicated region
    $region18: #{tpu_custom_call.1} parent=1 // pred_check
      _
    $region19: #{tpu_custom_call.1} parent=1 // pred_check_branch
      %22 = sbr.rel (0) target = $region21
    $region20: #{tpu_custom_call.1} parent=1 // pred_region
      _
    $region21: #{tpu_custom_call.1} parent=1 // pred_fallthru
      _
    // Predicated region
    $region22: #{tpu_custom_call.1} parent=1 // pred_check
      _
    $region23: #{tpu_custom_call.1} parent=1 // pred_check_branch
      %24 = sbr.rel (0) target = $region25
    $region24: #{tpu_custom_call.1} parent=1 // pred_region
      _
    $region25: #{tpu_custom_call.1} parent=1 // pred_fallthru
      _
    // Predicated region
    $region26: #{tpu_custom_call.1} parent=1 // pred_check
      _
    $region27: #{tpu_custom_call.1} parent=1 // pred_check_branch
      %26 = sbr.rel (0) target = $region29
    $region28: #{tpu_custom_call.1} parent=1 // pred_region
      _
    $region29: #{tpu_custom_call.1} parent=1 // pred_fallthru
      _
    %v27 = vld [vmem:[%s0] sm:$0xff]
    %v28 = vld [vmem:[%s1] sm:$0xff]
    %v29 = vld [vmem:[%s1 + $0x8] sm:$0xff]
    %v30 = vld [vmem:[%s2] sm:$0x1]
    %v32 = vlaneseq
    %v33 = vshrl.u32 %v32, 7
    %v34 = vsub.s32 0, %v33
    %v35 = vrot.slane %v30, %v34
    %vm37 = vcmask 130048
    %v39 = vsel %vm37, %v27, 0
    %41 = vmatprep.subr.mxu0 0.0
    %42 = vmatpush1.msra.mxu0 %v28
    %43 = vmatprep.subr.mxu0 0.0
    %44 = vmatpush1.msra.mxu0 %v29
    %45 = vmatprep.subr.mxu0 0.0
    %46 = vmatpush1.msra.mxu0 0.0
    %47 = vmatprep.subr.mxu0 0.0
    %48 = vmatpush1.msra.mxu0 0.0
    %49 = vmatprep.subr.mxu0 0.0
    %50 = vmatpush1.msra.mxu0 0.0
    %51 = vmatprep.subr.mxu0 0.0
    %52 = vmatpush1.msra.mxu0 0.0
    %53 = vmatprep.subr.mxu0 0.0
    %54 = vmatpush1.msra.mxu0 0.0
    %55 = vmatprep.subr.mxu0 0.0
    %56 = vmatpush1.msra.mxu0 0.0
    %57 = vmatprep.subr.mxu0 0.0
    %58 = vmatpush1.msra.mxu0 0.0
    %59 = vmatprep.subr.mxu0 0.0
    %60 = vmatpush1.msra.mxu0 0.0
    %61 = vmatprep.subr.mxu0 0.0
    %62 = vmatpush1.msra.mxu0 0.0
    %63 = vmatprep.subr.mxu0 0.0
    %64 = vmatpush1.msra.mxu0 0.0
    %65 = vmatprep.subr.mxu0 0.0
    %66 = vmatpush1.msra.mxu0 0.0
    %67 = vmatprep.subr.mxu0 0.0
    %68 = vmatpush1.msra.mxu0 0.0
    %69 = vmatprep.subr.mxu0 0.0
    %70 = vmatpush1.msra.mxu0 0.0
    %71 = vmatprep.subr.mxu0 0.0
    %72 = vmatpush1.msra.mxu0 0.0
    %73 = vmatprep.subr.mxu0 0.0
    %74 = vmatpush1.msra.mxu0 0.0
    %75 = vmatprep.subr.mxu0 0.0
    %76 = vmatpush1.msra.mxu0 0.0
    %77 = vmatprep.subr.mxu0 0.0
    %78 = vmatpush1.msra.mxu0 0.0
    %79 = vmatprep.subr.mxu0 0.0
    %80 = vmatpush1.msra.mxu0 0.0
    %81 = vmatprep.subr.mxu0 0.0
    %82 = vmatpush1.msra.mxu0 0.0
    %83 = vmatprep.subr.mxu0 0.0
    %84 = vmatpush1.msra.mxu0 0.0
    %85 = vmatprep.subr.mxu0 0.0
    %86 = vmatpush1.msra.mxu0 0.0
    %87 = vmatprep.subr.mxu0 0.0
    %88 = vmatpush1.msra.mxu0 0.0
    %89 = vmatprep.subr.mxu0 0.0
    %90 = vmatpush1.msra.mxu0 0.0
    %91 = vmatprep.subr.mxu0 0.0
    %92 = vmatpush1.msra.mxu0 0.0
    %93 = vmatprep.subr.mxu0 0.0
    %94 = vmatpush1.msra.mxu0 0.0
    %95 = vmatprep.subr.mxu0 0.0
    %96 = vmatpush1.msra.mxu0 0.0
    %97 = vmatprep.subr.mxu0 0.0
    %98 = vmatpush1.msra.mxu0 0.0
    %99 = vmatprep.subr.mxu0 0.0
    %100 = vmatpush1.msra.mxu0 0.0
    %101 = vmatprep.subr.mxu0 0.0
    %102 = vmatpush1.msra.mxu0 0.0
    %103 = vmatprep.subr.mxu0 0.0
    %104 = vmatpush1.msra.mxu0 0.0
    %105 = vmatprep.mubr.f32.mxu0 0.0
    %106 = vmatmul.mubr.f32.gmra.mrb[0].mxu0 %v39
    %v107 = vpop.f32.mrb[0].mxu0
    %v108 = vadd.f32 %v35, %v107
    %v109 = vpop.f32.mrb[0].mxu0
    %110 = vdwg.mxu0
    %v111 = vmul.f32 %v108, 0.5
    %v112 = vtanh.pop %v111
    %v113 = vmul.f32 %v112, 0.5
    %v114 = vadd.f32 %v113, 0.5
    %v115 = vld [vmem:[%s3] sm:$0xff]
    %v116 = vld [vmem:[%s3 + $0x8] sm:$0xff]
    %v117 = vld [vmem:[%s3 + $0x10] sm:$0xff]
    %v118 = vld [vmem:[%s3 + $0x18] sm:$0xff]
    %v119 = vld [vmem:[%s4] sm:$0x1]
    %v121 = vlaneseq
    %v122 = vshrl.u32 %v121, 7
    %v123 = vsub.s32 0, %v122
    %v124 = vrot.slane %v119, %v123
    %vm126 = vcmask 261120
    %v128 = vsel %vm126, %v114, 0
    %130 = vmatprep.subr.mxu0 0.0
    %131 = vmatpush1.msra.mxu0 %v115
    %132 = vmatprep.subr.mxu0 0.0
    %133 = vmatpush1.msra.mxu0 %v116
    %134 = vmatprep.subr.mxu0 0.0
    %135 = vmatpush1.msra.mxu0 %v117
    %136 = vmatprep.subr.mxu0 0.0
    %137 = vmatpush1.msra.mxu0 %v118
    %138 = vmatprep.subr.mxu0 0.0
    %139 = vmatpush1.msra.mxu0 0.0
    %140 = vmatprep.subr.mxu0 0.0
    %141 = vmatpush1.msra.mxu0 0.0
    %142 = vmatprep.subr.mxu0 0.0
    %143 = vmatpush1.msra.mxu0 0.0
    %144 = vmatprep.subr.mxu0 0.0
    %145 = vmatpush1.msra.mxu0 0.0
    %146 = vmatprep.subr.mxu0 0.0
    %147 = vmatpush1.msra.mxu0 0.0
    %148 = vmatprep.subr.mxu0 0.0
    %149 = vmatpush1.msra.mxu0 0.0
    %150 = vmatprep.subr.mxu0 0.0
    %151 = vmatpush1.msra.mxu0 0.0
    %152 = vmatprep.subr.mxu0 0.0
    %153 = vmatpush1.msra.mxu0 0.0
    %154 = vmatprep.subr.mxu0 0.0
    %155 = vmatpush1.msra.mxu0 0.0
    %156 = vmatprep.subr.mxu0 0.0
    %157 = vmatpush1.msra.mxu0 0.0
    %158 = vmatprep.subr.mxu0 0.0
    %159 = vmatpush1.msra.mxu0 0.0
    %160 = vmatprep.subr.mxu0 0.0
    %161 = vmatpush1.msra.mxu0 0.0
    %162 = vmatprep.subr.mxu0 0.0
    %163 = vmatpush1.msra.mxu0 0.0
    %164 = vmatprep.subr.mxu0 0.0
    %165 = vmatpush1.msra.mxu0 0.0
    %166 = vmatprep.subr.mxu0 0.0
    %167 = vmatpush1.msra.mxu0 0.0
    %168 = vmatprep.subr.mxu0 0.0
    %169 = vmatpush1.msra.mxu0 0.0
    %170 = vmatprep.subr.mxu0 0.0
    %171 = vmatpush1.msra.mxu0 0.0
    %172 = vmatprep.subr.mxu0 0.0
    %173 = vmatpush1.msra.mxu0 0.0
    %174 = vmatprep.subr.mxu0 0.0
    %175 = vmatpush1.msra.mxu0 0.0
    %176 = vmatprep.subr.mxu0 0.0
    %177 = vmatpush1.msra.mxu0 0.0
    %178 = vmatprep.subr.mxu0 0.0
    %179 = vmatpush1.msra.mxu0 0.0
    %180 = vmatprep.subr.mxu0 0.0
    %181 = vmatpush1.msra.mxu0 0.0
    %182 = vmatprep.subr.mxu0 0.0
    %183 = vmatpush1.msra.mxu0 0.0
    %184 = vmatprep.subr.mxu0 0.0
    %185 = vmatpush1.msra.mxu0 0.0
    %186 = vmatprep.subr.mxu0 0.0
    %187 = vmatpush1.msra.mxu0 0.0
    %188 = vmatprep.subr.mxu0 0.0
    %189 = vmatpush1.msra.mxu0 0.0
    %190 = vmatprep.subr.mxu0 0.0
    %191 = vmatpush1.msra.mxu0 0.0
    %192 = vmatprep.subr.mxu0 0.0
    %193 = vmatpush1.msra.mxu0 0.0
    %194 = vmatprep.mubr.f32.mxu0 0.0
    %195 = vmatmul.mubr.f32.gmra.mrb[0].mxu0 %v128
    %v196 = vpop.f32.mrb[0].mxu0
    %v197 = vadd.f32 %v124, %v196
    %v198 = vpop.f32.mrb[0].mxu0
    %199 = vdwg.mxu0
    %v200 = vmul.f32 %v197, 0.5
    %v201 = vtanh.pop %v200
    %v202 = vmul.f32 %v201, 0.5
    %v203 = vadd.f32 %v202, 0.5
    %v204 = vld [vmem:[%s5] sm:$0xff]
    %v205 = vld [vmem:[%s5 + $0x8] sm:$0xff]
    %v206 = vld [vmem:[%s5 + $0x10] sm:$0xff]
    %v207 = vld [vmem:[%s5 + $0x18] sm:$0xff]
    %v208 = vld [vmem:[%s6] sm:$0x1]
    %v210 = vlaneseq
    %v211 = vshrl.u32 %v210, 7
    %v212 = vsub.s32 0, %v211
    %v213 = vrot.slane %v208, %v212
    %v216 = vsel %vm126, %v203, 0
    %218 = vmatprep.subr.mxu0 0.0
    %219 = vmatpush1.msra.mxu0 %v204
    %220 = vmatprep.subr.mxu0 0.0
    %221 = vmatpush1.msra.mxu0 %v205
    %222 = vmatprep.subr.mxu0 0.0
    %223 = vmatpush1.msra.mxu0 %v206
    %224 = vmatprep.subr.mxu0 0.0
    %225 = vmatpush1.msra.mxu0 %v207
    %226 = vmatprep.subr.mxu0 0.0
    %227 = vmatpush1.msra.mxu0 0.0
    %228 = vmatprep.subr.mxu0 0.0
    %229 = vmatpush1.msra.mxu0 0.0
    %230 = vmatprep.subr.mxu0 0.0
    %231 = vmatpush1.msra.mxu0 0.0
    %232 = vmatprep.subr.mxu0 0.0
    %233 = vmatpush1.msra.mxu0 0.0
    %234 = vmatprep.subr.mxu0 0.0
    %235 = vmatpush1.msra.mxu0 0.0
    %236 = vmatprep.subr.mxu0 0.0
    %237 = vmatpush1.msra.mxu0 0.0
    %238 = vmatprep.subr.mxu0 0.0
    %239 = vmatpush1.msra.mxu0 0.0
    %240 = vmatprep.subr.mxu0 0.0
    %241 = vmatpush1.msra.mxu0 0.0
    %242 = vmatprep.subr.mxu0 0.0
    %243 = vmatpush1.msra.mxu0 0.0
    %244 = vmatprep.subr.mxu0 0.0
    %245 = vmatpush1.msra.mxu0 0.0
    %246 = vmatprep.subr.mxu0 0.0
    %247 = vmatpush1.msra.mxu0 0.0
    %248 = vmatprep.subr.mxu0 0.0
    %249 = vmatpush1.msra.mxu0 0.0
    %250 = vmatprep.subr.mxu0 0.0
    %251 = vmatpush1.msra.mxu0 0.0
    %252 = vmatprep.subr.mxu0 0.0
    %253 = vmatpush1.msra.mxu0 0.0
    %254 = vmatprep.subr.mxu0 0.0
    %255 = vmatpush1.msra.mxu0 0.0
    %256 = vmatprep.subr.mxu0 0.0
    %257 = vmatpush1.msra.mxu0 0.0
    %258 = vmatprep.subr.mxu0 0.0
    %259 = vmatpush1.msra.mxu0 0.0
    %260 = vmatprep.subr.mxu0 0.0
    %261 = vmatpush1.msra.mxu0 0.0
    %262 = vmatprep.subr.mxu0 0.0
    %263 = vmatpush1.msra.mxu0 0.0
    %264 = vmatprep.subr.mxu0 0.0
    %265 = vmatpush1.msra.mxu0 0.0
    %266 = vmatprep.subr.mxu0 0.0
    %267 = vmatpush1.msra.mxu0 0.0
    %268 = vmatprep.subr.mxu0 0.0
    %269 = vmatpush1.msra.mxu0 0.0
    %270 = vmatprep.subr.mxu0 0.0
    %271 = vmatpush1.msra.mxu0 0.0
    %272 = vmatprep.subr.mxu0 0.0
    %273 = vmatpush1.msra.mxu0 0.0
    %274 = vmatprep.subr.mxu0 0.0
    %275 = vmatpush1.msra.mxu0 0.0
    %276 = vmatprep.subr.mxu0 0.0
    %277 = vmatpush1.msra.mxu0 0.0
    %278 = vmatprep.subr.mxu0 0.0
    %279 = vmatpush1.msra.mxu0 0.0
    %280 = vmatprep.subr.mxu0 0.0
    %281 = vmatpush1.msra.mxu0 0.0
    %282 = vmatprep.mubr.f32.mxu0 0.0
    %283 = vmatmul.mubr.f32.gmra.mrb[0].mxu0 %v216
    %v284 = vpop.f32.mrb[0].mxu0
    %v285 = vadd.f32 %v213, %v284
    %v286 = vpop.f32.mrb[0].mxu0
    %287 = vdwg.mxu0
    %vm288 = vcmask 195584
    %289 = vst.msk [vmem:[#allocation2] sm:$0xff] %vm288, %v285
    // Predicated region
    $region30: #{tpu_custom_call.1} parent=1 // pred_check
      _
    $region31: #{tpu_custom_call.1} parent=1 // pred_check_branch
      %291 = sbr.rel (0) target = $region33
    $region32: #{tpu_custom_call.1} parent=1 // pred_region
      %s293 = ssub.s32 128, 128
      %294 = vsyncadd [#allocation3], %s293
      %s296 = sshll.u32 [#allocation2], 4
      %s297 = int_to_ptr.vmem [resolvable:$true] %s296
      %299 = dma.vmem_to_hbm [thread:$0]  %s297, 128, %s7, [#allocation3]
    $region33: #{tpu_custom_call.1} parent=1 // pred_fallthru
      _
    // Predicated region
    $region34: #{tpu_custom_call.1} parent=1 // pred_check
      _
    $region35: #{tpu_custom_call.1} parent=1 // pred_check_branch
      %301 = sbr.rel (0) target = $region37
    $region36: #{tpu_custom_call.1} parent=1 // pred_region
      %302 = dma.done [#allocation3], 128
    $region37: #{tpu_custom_call.1} parent=1 // pred_fallthru
      _
    %303 = vsyncpa [#allocation3], 1

</llo_original>
